<compile_context>
chip_gen: v7x
topology: tpu7x:2x2x1
jax: 0.10.0
libtpu: 0.0.40
codegen_flags: <defaults>
</compile_context>

<pallas_src>
import jax
import jax.numpy as jnp
from jax.experimental import pallas as pl
from jax.experimental.pallas import tpu as pltpu


def _cdiv(a: int, b: int) -> int:
    return -(-a // b)


def _round_up(x: int, m: int) -> int:
    return _cdiv(x, m) * m


def _fit_tile(dim: int, t_max: int, gran: int) -> int:
    """Tile size <= ~t_max that minimizes padding of `dim`."""
    n = _cdiv(dim, t_max)
    return _round_up(_cdiv(dim, n), gran)


# ---------------------------------------------------------------------------
# Single-block kernel: whole problem resident in VMEM, no grid.
# ---------------------------------------------------------------------------
def _affine_single_block_kernel(x_ref, w_ref, b_ref, o_ref):
    acc = jnp.dot(x_ref[...], w_ref[...], preferred_element_type=jnp.float32)
    o_ref[...] = (acc + b_ref[...].astype(jnp.float32)).astype(o_ref.dtype)


# ---------------------------------------------------------------------------
# Tiled kernels: grid = (M//tm, N//tn, Kp//tk), K axis last ("arbitrary").
# ---------------------------------------------------------------------------
def _affine_tiled_kernel_f32(x_ref, w_ref, b_ref, o_ref):
    """f32 output: accumulate directly into the resident output block."""
    k = pl.program_id(2)

    @pl.when(k == 0)
    def _():
        o_ref[...] = jnp.broadcast_to(b_ref[...], o_ref.shape)

    o_ref[...] += jnp.dot(x_ref[...], w_ref[...],
                          preferred_element_type=jnp.float32)


def _affine_tiled_kernel_acc(x_ref, w_ref, b_ref, o_ref, acc_ref):
    """Non-f32 output: f32 scratch accumulator, cast once at the end."""
    k = pl.program_id(2)

    @pl.when(k == 0)
    def _():
        acc_ref[...] = jnp.broadcast_to(b_ref[...].astype(jnp.float32),
                                        acc_ref.shape)

    acc_ref[...] += jnp.dot(x_ref[...], w_ref[...],
                            preferred_element_type=jnp.float32)

    @pl.when(k == pl.num_programs(2) - 1)
    def _():
        o_ref[...] = acc_ref[...].astype(o_ref.dtype)


def affine(x, w, b, *, tm_max=512, tn_max=1024, tk_max=512):
    """y = x @ w + b  (same semantics as the PyTorch Affine.forward)."""
    M, K = x.shape
    K2, N = w.shape
    assert K == K2 and b.shape == (N,)
    out_dtype = x.dtype

    b2 = b.reshape(1, N)  # 2D for TPU vreg layout

    # ---- tiny-problem fast path: single block, no grid ---------------------
    if M <= 256 and K <= 512 and N <= 512:
        return pl.pallas_call(
            _affine_single_block_kernel,
            out_shape=jax.ShapeDtypeStruct((M, N), out_dtype),
            in_specs=[pl.BlockSpec(memory_space=pltpu.MemorySpace.VMEM)] * 3,
            out_specs=pl.BlockSpec(memory_space=pltpu.MemorySpace.VMEM),
        )(x, w, b2)

    # ---- general tiled path -------------------------------------------------
    sub = 16 if out_dtype == jnp.bfloat16 else 8  # sublane packing for M tiles

    tm = _fit_tile(M, tm_max, sub)
    tn = _fit_tile(N, tn_max, 128)
    tk = _fit_tile(K, tk_max, 128)

    # Guarantee >=2 parallel (i, j) output tiles when possible so both
    # TensorCores on v7x (megacore) get scheduled.
    if _cdiv(M, tm) * _cdiv(N, tn) < 2:
        if tn >= 256:
            tn = _round_up(_cdiv(N, 2), 128)
        elif tm >= 2 * sub:
            tm = _round_up(_cdiv(M, 2), sub)

    # Zero-pad K only (required for correctness: garbage in a partial K tile
    # of x would multiply garbage rows of w).  M / N raggedness is handled by
    # partial edge blocks -- out-of-bounds output writes are dropped.
    # For static weights, pre-pad K once outside the jit'd call instead.
    Kp = _round_up(K, tk)
    if Kp != K:
        x = jnp.pad(x, ((0, 0), (0, Kp - K)))
        w = jnp.pad(w, ((0, Kp - K), (0, 0)))

    grid = (_cdiv(M, tm), _cdiv(N, tn), Kp // tk)

    if out_dtype == jnp.float32:
        kernel = _affine_tiled_kernel_f32
        scratch = []
    else:
        kernel = _affine_tiled_kernel_acc
        scratch = [pltpu.VMEM((tm, tn), jnp.float32)]

    return pl.pallas_call(
        kernel,
        out_shape=jax.ShapeDtypeStruct((M, N), out_dtype),
        grid_spec=pltpu.PrefetchScalarGridSpec(
            num_scalar_prefetch=0,
            grid=grid,
            in_specs=[
                pl.BlockSpec((tm, tk), lambda i, j, k: (i, k)),  # x row tile
                pl.BlockSpec((tk, tn), lambda i, j, k: (k, j)),  # weight tile
                pl.BlockSpec((1, tn), lambda i, j, k: (0, j)),   # bias tile
            ],
            out_specs=pl.BlockSpec((tm, tn), lambda i, j, k: (i, j)),
            scratch_shapes=scratch,
        ),
        compiler_params=pltpu.CompilerParams(
            dimension_semantics=("parallel", "parallel", "arbitrary"),
        ),
    )(x, w, b2)


if __name__ == "__main__":
    key = jax.random.PRNGKey(0)
    kx, kw, kb, kx2, kw2, kb2 = jax.random.split(key, 6)

    # Small shapes consistent with the module: batch=16, in_features=32,
    # out_features=64 (takes the single-block fast path).
    M, IN, OUT = 16, 32, 64
    x = jax.random.normal(kx, (M, IN), dtype=jnp.float32)
    w = jax.random.normal(kw, (IN, OUT), dtype=jnp.float32)  # torch.randn init
    b = jax.random.normal(kb, (OUT,), dtype=jnp.float32)

    y = affine(x, w, b)
    jax.block_until_ready(y)
    y_ref = x @ w + b[None, :]
    assert y.shape == (M, OUT)
    assert jnp.allclose(y, y_ref, atol=1e-5, rtol=1e-5)

    # Exercise the tiled (M, N, K) path with a non-tile-aligned shape; the
    # new tile-fit heuristic uses ~304x384/768x384 tiles instead of padding
    # to 512x1024x1024.
    M2, IN2, OUT2 = 300, 600, 700
    x2 = jax.random.normal(kx2, (M2, IN2), dtype=jnp.float32)
    w2 = jax.random.normal(kw2, (IN2, OUT2), dtype=jnp.float32)
    bb2 = jax.random.normal(kb2, (OUT2,), dtype=jnp.float32)

    y2 = affine(x2, w2, bb2)
    jax.block_until_ready(y2)
    y2_ref = x2 @ w2 + bb2[None, :]
    assert y2.shape == (M2, OUT2)
    assert jnp.allclose(y2, y2_ref, atol=5e-3, rtol=5e-3)

    print("KERNEL_OK")
</pallas_src>

<mosaic_0001>
module attributes {stable_mosaic.version = 11 : i64} {
  func.func @_affine_single_block_kernel(%arg0: memref<16x32xf32, #tpu.memory_space<vmem>>, %arg1: memref<32x64xf32, #tpu.memory_space<vmem>>, %arg2: memref<1x64xf32, #tpu.memory_space<vmem>>, %arg3: memref<16x64xf32, #tpu.memory_space<vmem>>) attributes {dimension_semantics = [], scalar_prefetch = 0 : i64, scratch_operands = 0 : i64, tpu.core_type = #tpu.core_type<tc>} {
    %c0 = arith.constant 0 : index
    %c0_0 = arith.constant 0 : index
    %0 = vector.load %arg0[%c0, %c0_0] : memref<16x32xf32, #tpu.memory_space<vmem>>, vector<16x32xf32>
    %c0_1 = arith.constant 0 : index
    %c0_2 = arith.constant 0 : index
    %1 = vector.load %arg1[%c0_1, %c0_2] : memref<32x64xf32, #tpu.memory_space<vmem>>, vector<32x64xf32>
    %cst = arith.constant dense<0.000000e+00> : vector<16x64xf32>
    %2 = tpu.matmul %0, %1, %cst {dimension_numbers = #tpu.dot_dimension_numbers<[1], [0], [0], [1], [0, 0, 1, 1], [], []>} : vector<16x32xf32>, vector<32x64xf32>, vector<16x64xf32> -> vector<16x64xf32>
    %c0_3 = arith.constant 0 : index
    %c0_4 = arith.constant 0 : index
    %3 = vector.load %arg2[%c0_3, %c0_4] : memref<1x64xf32, #tpu.memory_space<vmem>>, vector<1x64xf32>
    %4 = vector.broadcast %3 : vector<1x64xf32> to vector<16x64xf32>
    %5 = arith.addf %2, %4 : vector<16x64xf32>
    %c0_5 = arith.constant 0 : index
    %c0_6 = arith.constant 0 : index
    %6 = vector.load %arg3[%c0_5, %c0_6] : memref<16x64xf32, #tpu.memory_space<vmem>>, vector<16x64xf32>
    tpu.vector_store %arg3[%c0_5, %c0_6], %5 {strides = array<i32>} : memref<16x64xf32, #tpu.memory_space<vmem>>, vector<16x64xf32>,
    return
  }
}

</mosaic_0001>

<llo_original>
// kernel: tpu_custom_call.1
$region0: #{tpu_custom_call.1}
  #allocation0 [shape = 'u32[]', space=smem, size = 0x4, offset = 0x4, fixed_abs, tag = 'smem constant byte address 0x4 - core index']
  #allocation1 [shape = 'u32[144,128]{1,0:T(1,128)}', space=vmem, size = 0x12000, scoped, tag = 'internal scratch']
  %s0 = inlined_call_operand.hbm [shape: f32[16,32], index: 0, kind: input, shape index: {}]
  %s1 = inlined_call_operand.hbm [shape: f32[32,64], index: 1, kind: input, shape index: {}]
  %s2 = inlined_call_operand.vmem [shape: f32[1,64], index: 2, kind: input, shape index: {}]
  %s3 = inlined_call_operand.hbm [shape: f32[16,64], index: 3, kind: output, shape index: {}]
  %s4 = sld [smem:[#allocation0]]
  $region30: #{tpu_custom_call.1} parent=0
    _
  %s6 = ssub.s32 1, %s4
  %s7 = scalar_select 0, %s6, %s4
  $region1: #{tpu_custom_call.1} parent=0
    #allocation2 [shape = 'u8[8192]{0}', space=vmem, size = 0x2000, scoped, tag = 'input window, operand 0, single buffered']
    #allocation3 [shape = 's32[1]{0}', space=sflag, size = 0x4, scoped, tag = 'scoped memory for tpu_custom_call.1']
    #allocation4 [shape = 's32[1]{0}', space=sflag, size = 0x4, scoped, tag = 'scoped memory for tpu_custom_call.1']
    #allocation5 [shape = 'u8[16384]{0}', space=vmem, size = 0x4000, scoped, tag = 'input window, operand 1, single buffered']
    #allocation6 [shape = 's32[1]{0}', space=sflag, size = 0x4, scoped, tag = 'scoped memory for tpu_custom_call.1']
    #allocation7 [shape = 'u8[8192]{0}', space=vmem, size = 0x2000, scoped, tag = 'output window, operand 0, single buffered']
    %8 = vsyncpa [#allocation3], 0
    %9 = vsyncpa [#allocation6], 0
    %10 = vsyncpa [#allocation4], 0
    // Predicated region
    $region2: #{tpu_custom_call.1} parent=1 // pred_check
      _
    $region3: #{tpu_custom_call.1} parent=1 // pred_check_branch
      %12 = sbr.rel (0) target = $region5
    $region4: #{tpu_custom_call.1} parent=1 // pred_region
      %s14 = ssub.s32 256, 256
      %15 = vsyncadd [#allocation3], %s14
      %s16 = sshll.u32 [#allocation2], 4
      %s17 = int_to_ptr.vmem [resolvable:$true] %s16
      %22 = dma.hbm_to_vmem [thread:$0]  %s0, 256, %s17, [#allocation3], 128, 128, 8
    $region5: #{tpu_custom_call.1} parent=1 // pred_fallthru
      _
    // Predicated region
    $region6: #{tpu_custom_call.1} parent=1 // pred_check
      _
    $region7: #{tpu_custom_call.1} parent=1 // pred_check_branch
      %24 = sbr.rel (0) target = $region9
    $region8: #{tpu_custom_call.1} parent=1 // pred_region
      %s26 = ssub.s32 512, 512
      %27 = vsyncadd [#allocation6], %s26
      %s28 = sshll.u32 [#allocation5], 4
      %s29 = int_to_ptr.vmem [resolvable:$true] %s28
      %34 = dma.hbm_to_vmem [thread:$0]  %s1, 512, %s29, [#allocation6], 128, 128, 8
    $region9: #{tpu_custom_call.1} parent=1 // pred_fallthru
      _
    // Predicated region
    $region10: #{tpu_custom_call.1} parent=1 // pred_check
      _
    $region11: #{tpu_custom_call.1} parent=1 // pred_check_branch
      %36 = sbr.rel (0) target = $region13
    $region12: #{tpu_custom_call.1} parent=1 // pred_region
      _
    $region13: #{tpu_custom_call.1} parent=1 // pred_fallthru
      _
    // Predicated region
    $region14: #{tpu_custom_call.1} parent=1 // pred_check
      _
    $region15: #{tpu_custom_call.1} parent=1 // pred_check_branch
      %38 = sbr.rel (0) target = $region17
    $region16: #{tpu_custom_call.1} parent=1 // pred_region
      %39 = dma.done [#allocation3], 256
    $region17: #{tpu_custom_call.1} parent=1 // pred_fallthru
      _
    // Predicated region
    $region18: #{tpu_custom_call.1} parent=1 // pred_check
      _
    $region19: #{tpu_custom_call.1} parent=1 // pred_check_branch
      %41 = sbr.rel (0) target = $region21
    $region20: #{tpu_custom_call.1} parent=1 // pred_region
      %42 = dma.done [#allocation6], 512
    $region21: #{tpu_custom_call.1} parent=1 // pred_fallthru
      _
    %v43 = vld [vmem:[#allocation2] sm:$0xff]
    %v44 = vld [vmem:[#allocation2 + $0x8] sm:$0xff]
    %v45 = vld [vmem:[#allocation5] sm:$0xff]
    %v46 = vld [vmem:[#allocation5 + $0x8] sm:$0xff]
    %v47 = vld [vmem:[#allocation5 + $0x10] sm:$0xff]
    %v48 = vld [vmem:[#allocation5 + $0x18] sm:$0xff]
    %v49 = vld [vmem:[%s2] sm:$0x1]
    %v51 = vlaneseq
    %v52 = vshrl.u32 %v51, 7
    %v53 = vsub.s32 0, %v52
    %v54 = vrot.slane %v49, %v53
    %vm56 = vcmask 261120
    %v58 = vsel %vm56, %v43, 0
    %v61 = vsel %vm56, %v44, 0
    %63 = vmatprep.subr.mxu0 0.0
    %64 = vmatpush1.msra.mxu0 %v45
    %65 = vmatprep.subr.mxu0 0.0
    %66 = vmatpush1.msra.mxu0 %v46
    %67 = vmatprep.subr.mxu0 0.0
    %68 = vmatpush1.msra.mxu0 %v47
    %69 = vmatprep.subr.mxu0 0.0
    %70 = vmatpush1.msra.mxu0 %v48
    %71 = vmatprep.subr.mxu0 0.0
    %72 = vmatpush1.msra.mxu0 0.0
    %73 = vmatprep.subr.mxu0 0.0
    %74 = vmatpush1.msra.mxu0 0.0
    %75 = vmatprep.subr.mxu0 0.0
    %76 = vmatpush1.msra.mxu0 0.0
    %77 = vmatprep.subr.mxu0 0.0
    %78 = vmatpush1.msra.mxu0 0.0
    %79 = vmatprep.subr.mxu0 0.0
    %80 = vmatpush1.msra.mxu0 0.0
    %81 = vmatprep.subr.mxu0 0.0
    %82 = vmatpush1.msra.mxu0 0.0
    %83 = vmatprep.subr.mxu0 0.0
    %84 = vmatpush1.msra.mxu0 0.0
    %85 = vmatprep.subr.mxu0 0.0
    %86 = vmatpush1.msra.mxu0 0.0
    %87 = vmatprep.subr.mxu0 0.0
    %88 = vmatpush1.msra.mxu0 0.0
    %89 = vmatprep.subr.mxu0 0.0
    %90 = vmatpush1.msra.mxu0 0.0
    %91 = vmatprep.subr.mxu0 0.0
    %92 = vmatpush1.msra.mxu0 0.0
    %93 = vmatprep.subr.mxu0 0.0
    %94 = vmatpush1.msra.mxu0 0.0
    %95 = vmatprep.subr.mxu0 0.0
    %96 = vmatpush1.msra.mxu0 0.0
    %97 = vmatprep.subr.mxu0 0.0
    %98 = vmatpush1.msra.mxu0 0.0
    %99 = vmatprep.subr.mxu0 0.0
    %100 = vmatpush1.msra.mxu0 0.0
    %101 = vmatprep.subr.mxu0 0.0
    %102 = vmatpush1.msra.mxu0 0.0
    %103 = vmatprep.subr.mxu0 0.0
    %104 = vmatpush1.msra.mxu0 0.0
    %105 = vmatprep.subr.mxu0 0.0
    %106 = vmatpush1.msra.mxu0 0.0
    %107 = vmatprep.subr.mxu0 0.0
    %108 = vmatpush1.msra.mxu0 0.0
    %109 = vmatprep.subr.mxu0 0.0
    %110 = vmatpush1.msra.mxu0 0.0
    %111 = vmatprep.subr.mxu0 0.0
    %112 = vmatpush1.msra.mxu0 0.0
    %113 = vmatprep.subr.mxu0 0.0
    %114 = vmatpush1.msra.mxu0 0.0
    %115 = vmatprep.subr.mxu0 0.0
    %116 = vmatpush1.msra.mxu0 0.0
    %117 = vmatprep.subr.mxu0 0.0
    %118 = vmatpush1.msra.mxu0 0.0
    %119 = vmatprep.subr.mxu0 0.0
    %120 = vmatpush1.msra.mxu0 0.0
    %121 = vmatprep.subr.mxu0 0.0
    %122 = vmatpush1.msra.mxu0 0.0
    %123 = vmatprep.subr.mxu0 0.0
    %124 = vmatpush1.msra.mxu0 0.0
    %125 = vmatprep.subr.mxu0 0.0
    %126 = vmatpush1.msra.mxu0 0.0
    %127 = vmatprep.mubr.f32.mxu0 0.0
    %128 = vmatmul.mubr.f32.gmra.mrb[0].mxu0 %v58
    %v129 = vpop.f32.mrb[0].mxu0
    %v130 = vadd.f32 %v54, %v129
    %v131 = vpop.f32.mrb[0].mxu0
    %132 = vmatprep.mubr.f32.mxu0 0.0
    %133 = vmatmul.mubr.f32.gmra.mrb[0].mxu0 %v61
    %v134 = vpop.f32.mrb[0].mxu0
    %v135 = vadd.f32 %v54, %v134
    %v136 = vpop.f32.mrb[0].mxu0
    %137 = vdwg.mxu0
    %vm138 = vcmask 523264
    %139 = vst.msk [vmem:[#allocation7] sm:$0xff] %vm138, %v130
    %140 = vst.msk [vmem:[#allocation7 + $0x8] sm:$0xff] %vm138, %v135
    // Predicated region
    $region22: #{tpu_custom_call.1} parent=1 // pred_check
      _
    $region23: #{tpu_custom_call.1} parent=1 // pred_check_branch
      %142 = sbr.rel (0) target = $region25
    $region24: #{tpu_custom_call.1} parent=1 // pred_region
      %s144 = ssub.s32 256, 256
      %145 = vsyncadd [#allocation4], %s144
      %s146 = sshll.u32 [#allocation7], 4
      %s147 = int_to_ptr.vmem [resolvable:$true] %s146
      %152 = dma.vmem_to_hbm [thread:$0]  %s147, 256, %s3, [#allocation4], 128, 128, 8
    $region25: #{tpu_custom_call.1} parent=1 // pred_fallthru
      _
    // Predicated region
    $region26: #{tpu_custom_call.1} parent=1 // pred_check
      _
    $region27: #{tpu_custom_call.1} parent=1 // pred_check_branch
      %154 = sbr.rel (0) target = $region29
    $region28: #{tpu_custom_call.1} parent=1 // pred_region
      %155 = dma.done [#allocation4], 256
    $region29: #{tpu_custom_call.1} parent=1 // pred_fallthru
      _
    %156 = vsyncpa [#allocation3], 1
    %157 = vsyncpa [#allocation6], 1
    %158 = vsyncpa [#allocation4], 1

</llo_original>
